<compile_context>
chip_gen: v5e
topology: v5e:2x2
jax: 0.10.0
libtpu: 0.0.40
codegen_flags: <defaults>
</compile_context>

<pallas_src>
import math
import jax
import jax.numpy as jnp
from jax.experimental import pallas as pl
from jax.experimental.pallas import tpu as pltpu


def _round_up(x, m):
    return (x + m - 1) // m * m


def actor_kernel(x_ref, w1_ref, b1_ref, w2_ref, b2_ref, w3_ref, b3_ref, o_ref):
    # In-kernel cast of the f32 input tile to bf16 for the MXU (one VPU op).
    x = x_ref[...].astype(jnp.bfloat16)
    # fc1 + relu  (bf16 operands on the MXU, f32 accumulation; bias/relu in f32)
    h1 = jnp.dot(x, w1_ref[...], preferred_element_type=jnp.float32)
    h1 = jnp.maximum(h1 + b1_ref[...], 0.0)
    # fc2 + relu
    h2 = jnp.dot(h1.astype(jnp.bfloat16), w2_ref[...],
                 preferred_element_type=jnp.float32)
    h2 = jnp.maximum(h2 + b2_ref[...], 0.0)
    # fc3 + tanh  (output last dim padded to a multiple of 128 -> lane-dense store)
    h3 = jnp.dot(h2.astype(jnp.bfloat16), w3_ref[...],
                 preferred_element_type=jnp.float32)
    o_ref[...] = jnp.tanh(h3 + b3_ref[...]).astype(o_ref.dtype)


def prepare_actor_params(params):
    """One-time parameter prep: bf16 weights, f32 bias rows, lane-dense fc3.

    Call once (e.g. right after init / weight load) and reuse the result for
    every actor_forward invocation, so the cast/pad work is amortized.
    """
    w3 = params["w3"]
    A = int(w3.shape[1])
    A_pad = _round_up(max(A, 1), 128)
    pad3 = ((0, 0), (0, A_pad - A))
    return {
        "w1": params["w1"].astype(jnp.bfloat16),
        "b1": params["b1"].astype(jnp.float32).reshape(1, -1),
        "w2": params["w2"].astype(jnp.bfloat16),
        "b2": params["b2"].astype(jnp.float32).reshape(1, -1),
        "w3": jnp.pad(w3.astype(jnp.bfloat16), pad3),
        "b3": jnp.pad(params["b3"].astype(jnp.float32).reshape(1, -1), pad3),
        "num_actions": A,
        "a_pad": A_pad,
    }


def actor_forward(x, prep, *, batch_tile=None):
    """Run the Actor forward pass with a Pallas kernel.

    x: (B, input_dims) float32
    prep: output of prepare_actor_params (bf16 weights, padded fc3).
    Returns: (B, num_actions) float32.
    """
    w1, b1, w2, b2, w3, b3 = (prep[k] for k in ("w1", "b1", "w2", "b2", "w3", "b3"))
    A = prep["num_actions"]
    A_pad = prep["a_pad"]
    B, D = x.shape

    # ---- Batch tile selection ----
    #  * multiple of 16 (bf16 sublane packing for the output tile, 8 for f32 x)
    #  * cap 1024: per-step VMEM (x tile + f32 h1/h2 temporaries + weights +
    #    double-buffered bf16 output) stays ~5-6 MiB, inside every
    #    generation's scoped VMEM (v5e default 16 MiB).
    #  * when B fits in a single tile, split into ~2 steps so v7x's two
    #    TensorCores both get a "parallel" grid step (harmless on v5e/v6e).
    if batch_tile is None:
        cap = 1024
        if B > cap:
            tb = cap
        else:
            tb = max(16, _round_up(pl.cdiv(B, 2), 16))
    else:
        tb = int(batch_tile)
    assert tb % 16 == 0, "batch_tile must be a multiple of 16"

    steps = pl.cdiv(B, tb)
    grid = (steps,)

    def row_map(i):
        return (i, 0)

    def rep_map(i):
        return (0, 0)

    rows = steps * tb  # rows actually processed (last block masked on store)
    cost = pl.CostEstimate(
        flops=int(2 * rows * (D * 512 + 512 * 256 + 256 * A_pad)),
        transcendentals=int(rows * A_pad),  # tanh
        bytes_accessed=int(
            x.size * 4
            + (w1.size + w2.size + w3.size) * 2
            + (b1.size + b2.size + b3.size) * 4
            + B * A_pad * 2
        ),
    )

    out_pad = pl.pallas_call(
        actor_kernel,
        out_shape=jax.ShapeDtypeStruct((B, A_pad), jnp.bfloat16),
        grid_spec=pltpu.PrefetchScalarGridSpec(
            num_scalar_prefetch=0,
            grid=grid,
            in_specs=[
                pl.BlockSpec((tb, D), row_map),      # x tile (D = full array dim)
                pl.BlockSpec(w1.shape, rep_map),     # w1 (whole, grid-invariant)
                pl.BlockSpec(b1.shape, rep_map),     # b1
                pl.BlockSpec(w2.shape, rep_map),     # w2
                pl.BlockSpec(b2.shape, rep_map),     # b2
                pl.BlockSpec(w3.shape, rep_map),     # w3 (padded to A_pad)
                pl.BlockSpec(b3.shape, rep_map),     # b3 (padded to A_pad)
            ],
            out_specs=pl.BlockSpec((tb, A_pad), row_map),
        ),
        compiler_params=pltpu.CompilerParams(
            dimension_semantics=("parallel",),
            vmem_limit_bytes=32 * 1024 * 1024,
        ),
        cost_estimate=cost,
    )(x, w1, b1, w2, b2, w3, b3)

    # Slice the padded action lanes off and upcast the tiny (B, A) result.
    return out_pad[:, :A].astype(jnp.float32)


def init_actor_params(key, input_dims, num_actions):
    """Deterministic PyTorch-style Linear init: U(-1/sqrt(fan_in), 1/sqrt(fan_in))."""
    def linear(key, fan_in, fan_out):
        kw, kb = jax.random.split(key)
        bound = 1.0 / math.sqrt(fan_in)
        w = jax.random.uniform(kw, (fan_in, fan_out), jnp.float32, -bound, bound)
        b = jax.random.uniform(kb, (1, fan_out), jnp.float32, -bound, bound)
        return w, b

    k1, k2, k3 = jax.random.split(key, 3)
    w1, b1 = linear(k1, input_dims, 512)
    w2, b2 = linear(k2, 512, 256)
    w3, b3 = linear(k3, 256, num_actions)
    return {"w1": w1, "b1": b1, "w2": w2, "b2": b2, "w3": w3, "b3": b3}


def actor_reference(x, p):
    h1 = jnp.maximum(x @ p["w1"] + p["b1"], 0.0)
    h2 = jnp.maximum(h1 @ p["w2"] + p["b2"], 0.0)
    return jnp.tanh(h2 @ p["w3"] + p["b3"])


# TODO(synk): the Adam optimizer attached to the PyTorch module is training-time
# state and has no forward-pass Pallas equivalent; only forward() is implemented.

if __name__ == "__main__":
    key = jax.random.PRNGKey(0)
    k_params, k_x1, k_x2 = jax.random.split(key, 3)

    input_dims = 16
    num_actions = 4
    params = init_actor_params(k_params, input_dims, num_actions)
    prep = prepare_actor_params(params)  # one-time bf16 cast + lane-dense pad

    # Small case (B smaller than one tile; exercises masked partial block).
    batch = 8
    x = jax.random.normal(k_x1, (batch, input_dims), jnp.float32)
    out = jax.block_until_ready(actor_forward(x, prep))
    ref = actor_reference(x, params)
    assert out.shape == (batch, num_actions)
    # bf16 MXU operands / bf16 output with f32 accumulation -> relaxed tolerance.
    assert jnp.allclose(out, ref, atol=3e-2, rtol=3e-2)

    # Multi-step grid case (3 steps, ragged last block of 44 rows).
    batch2 = 300
    x2 = jax.random.normal(k_x2, (batch2, input_dims), jnp.float32)
    out2 = jax.block_until_ready(actor_forward(x2, prep, batch_tile=128))
    ref2 = actor_reference(x2, params)
    assert out2.shape == (batch2, num_actions)
    assert jnp.allclose(out2, ref2, atol=3e-2, rtol=3e-2)

    print("KERNEL_OK")
</pallas_src>

<mosaic_0001>
module attributes {stable_mosaic.version = 11 : i64} {
  func.func @actor_kernel(%arg0: i32, %arg1: memref<16x16xf32, #tpu.memory_space<vmem>>, %arg2: memref<16x512xbf16, #tpu.memory_space<vmem>>, %arg3: memref<1x512xf32, #tpu.memory_space<vmem>>, %arg4: memref<512x256xbf16, #tpu.memory_space<vmem>>, %arg5: memref<1x256xf32, #tpu.memory_space<vmem>>, %arg6: memref<256x128xbf16, #tpu.memory_space<vmem>>, %arg7: memref<1x128xf32, #tpu.memory_space<vmem>>, %arg8: memref<16x128xbf16, #tpu.memory_space<vmem>>) attributes {dimension_semantics = [#tpu.dimension_semantics<parallel>], iteration_bounds = array<i64: 1>, scalar_prefetch = 0 : i64, scratch_operands = 0 : i64, tpu.core_type = #tpu.core_type<tc>, window_params = [{transform_indices = @transform_0, window_bounds = array<i64: 16, 16>}, {pipeline_mode = #tpu.pipeline_mode<synchronous>, transform_indices = @transform_1, window_bounds = array<i64: 16, 512>}, {pipeline_mode = #tpu.pipeline_mode<synchronous>, transform_indices = @transform_2, window_bounds = array<i64: 1, 512>}, {pipeline_mode = #tpu.pipeline_mode<synchronous>, transform_indices = @transform_3, window_bounds = array<i64: 512, 256>}, {pipeline_mode = #tpu.pipeline_mode<synchronous>, transform_indices = @transform_4, window_bounds = array<i64: 1, 256>}, {pipeline_mode = #tpu.pipeline_mode<synchronous>, transform_indices = @transform_5, window_bounds = array<i64: 256, 128>}, {pipeline_mode = #tpu.pipeline_mode<synchronous>, transform_indices = @transform_6, window_bounds = array<i64: 1, 128>}, {transform_indices = @transform_7, window_bounds = array<i64: 16, 128>}]} {
    %c0 = arith.constant 0 : index
    %c0_0 = arith.constant 0 : index
    %0 = vector.load %arg1[%c0, %c0_0] : memref<16x16xf32, #tpu.memory_space<vmem>>, vector<16x16xf32>
    %1 = arith.truncf %0 : vector<16x16xf32> to vector<16x16xbf16>
    %c0_1 = arith.constant 0 : index
    %c0_2 = arith.constant 0 : index
    %2 = vector.load %arg2[%c0_1, %c0_2] : memref<16x512xbf16, #tpu.memory_space<vmem>>, vector<16x512xbf16>
    %cst = arith.constant dense<0.000000e+00> : vector<16x512xf32>
    %3 = tpu.matmul %1, %2, %cst {dimension_numbers = #tpu.dot_dimension_numbers<[1], [0], [0], [1], [0, 0, 1, 1], [], []>} : vector<16x16xbf16>, vector<16x512xbf16>, vector<16x512xf32> -> vector<16x512xf32>
    %c0_3 = arith.constant 0 : index
    %c0_4 = arith.constant 0 : index
    %4 = vector.load %arg3[%c0_3, %c0_4] : memref<1x512xf32, #tpu.memory_space<vmem>>, vector<1x512xf32>
    %5 = vector.broadcast %4 : vector<1x512xf32> to vector<16x512xf32>
    %6 = arith.addf %3, %5 : vector<16x512xf32>
    %cst_5 = arith.constant 0.000000e+00 : f32
    %7 = vector.broadcast %cst_5 : f32 to vector<16x512xf32>
    %8 = arith.maximumf %6, %7 : vector<16x512xf32>
    %9 = arith.truncf %8 : vector<16x512xf32> to vector<16x512xbf16>
    %c0_6 = arith.constant 0 : index
    %c0_7 = arith.constant 0 : index
    %10 = vector.load %arg4[%c0_6, %c0_7] : memref<512x256xbf16, #tpu.memory_space<vmem>>, vector<512x256xbf16>
    %cst_8 = arith.constant dense<0.000000e+00> : vector<16x256xf32>
    %11 = tpu.matmul %9, %10, %cst_8 {dimension_numbers = #tpu.dot_dimension_numbers<[1], [0], [0], [1], [0, 0, 1, 1], [], []>} : vector<16x512xbf16>, vector<512x256xbf16>, vector<16x256xf32> -> vector<16x256xf32>
    %c0_9 = arith.constant 0 : index
    %c0_10 = arith.constant 0 : index
    %12 = vector.load %arg5[%c0_9, %c0_10] : memref<1x256xf32, #tpu.memory_space<vmem>>, vector<1x256xf32>
    %13 = vector.broadcast %12 : vector<1x256xf32> to vector<16x256xf32>
    %14 = arith.addf %11, %13 : vector<16x256xf32>
    %cst_11 = arith.constant 0.000000e+00 : f32
    %15 = vector.broadcast %cst_11 : f32 to vector<16x256xf32>
    %16 = arith.maximumf %14, %15 : vector<16x256xf32>
    %17 = arith.truncf %16 : vector<16x256xf32> to vector<16x256xbf16>
    %c0_12 = arith.constant 0 : index
    %c0_13 = arith.constant 0 : index
    %18 = vector.load %arg6[%c0_12, %c0_13] : memref<256x128xbf16, #tpu.memory_space<vmem>>, vector<256x128xbf16>
    %cst_14 = arith.constant dense<0.000000e+00> : vector<16x128xf32>
    %19 = tpu.matmul %17, %18, %cst_14 {dimension_numbers = #tpu.dot_dimension_numbers<[1], [0], [0], [1], [0, 0, 1, 1], [], []>} : vector<16x256xbf16>, vector<256x128xbf16>, vector<16x128xf32> -> vector<16x128xf32>
    %c0_15 = arith.constant 0 : index
    %c0_16 = arith.constant 0 : index
    %20 = vector.load %arg7[%c0_15, %c0_16] : memref<1x128xf32, #tpu.memory_space<vmem>>, vector<1x128xf32>
    %21 = vector.broadcast %20 : vector<1x128xf32> to vector<16x128xf32>
    %22 = arith.addf %19, %21 : vector<16x128xf32>
    %23 = math.tanh %22 : vector<16x128xf32>
    %24 = arith.truncf %23 : vector<16x128xf32> to vector<16x128xbf16>
    %c0_17 = arith.constant 0 : index
    %c0_18 = arith.constant 0 : index
    %25 = vector.load %arg8[%c0_17, %c0_18] : memref<16x128xbf16, #tpu.memory_space<vmem>>, vector<16x128xbf16>
    tpu.vector_store %arg8[%c0_17, %c0_18], %24 {strides = array<i32>} : memref<16x128xbf16, #tpu.memory_space<vmem>>, vector<16x128xbf16>,
    return
  }
  func.func @transform_0(%arg0: i32) -> (i32, i32) {
    %c0_i32 = arith.constant 0 : i32
    %c0_i32_0 = arith.constant 0 : i32
    return %arg0, %c0_i32 : i32, i32
  }
  func.func @transform_1(%arg0: i32) -> (i32, i32) {
    %c0_i32 = arith.constant 0 : i32
    %c0_i32_0 = arith.constant 0 : i32
    %c0_i32_1 = arith.constant 0 : i32
    return %c0_i32, %c0_i32_0 : i32, i32
  }
  func.func @transform_2(%arg0: i32) -> (i32, i32) {
    %c0_i32 = arith.constant 0 : i32
    %c0_i32_0 = arith.constant 0 : i32
    %c0_i32_1 = arith.constant 0 : i32
    return %c0_i32, %c0_i32_0 : i32, i32
  }
  func.func @transform_3(%arg0: i32) -> (i32, i32) {
    %c0_i32 = arith.constant 0 : i32
    %c0_i32_0 = arith.constant 0 : i32
    %c0_i32_1 = arith.constant 0 : i32
    return %c0_i32, %c0_i32_0 : i32, i32
  }
  func.func @transform_4(%arg0: i32) -> (i32, i32) {
    %c0_i32 = arith.constant 0 : i32
    %c0_i32_0 = arith.constant 0 : i32
    %c0_i32_1 = arith.constant 0 : i32
    return %c0_i32, %c0_i32_0 : i32, i32
  }
  func.func @transform_5(%arg0: i32) -> (i32, i32) {
    %c0_i32 = arith.constant 0 : i32
    %c0_i32_0 = arith.constant 0 : i32
    %c0_i32_1 = arith.constant 0 : i32
    return %c0_i32, %c0_i32_0 : i32, i32
  }
  func.func @transform_6(%arg0: i32) -> (i32, i32) {
    %c0_i32 = arith.constant 0 : i32
    %c0_i32_0 = arith.constant 0 : i32
    %c0_i32_1 = arith.constant 0 : i32
    return %c0_i32, %c0_i32_0 : i32, i32
  }
  func.func @transform_7(%arg0: i32) -> (i32, i32) {
    %c0_i32 = arith.constant 0 : i32
    %c0_i32_0 = arith.constant 0 : i32
    return %arg0, %c0_i32 : i32, i32
  }
}

</mosaic_0001>

<llo_original>
// kernel: tpu_custom_call.1
$region0: #{tpu_custom_call.1}
  #allocation0 [shape = 'u32[]', space=smem, size = 0x4, offset = 0x4, fixed_abs, tag = 'smem constant byte address 0x4 - core index']
  #allocation1 [shape = 'u32[72,128]{1,0:T(1,128)}', space=vmem, size = 0x9000, scoped, tag = 'internal scratch']
  %s0 = inlined_call_operand.hbm [shape: f32[8,16], index: 0, kind: input, shape index: {}]
  %s1 = inlined_call_operand.hbm [shape: bf16[16,512], index: 1, kind: input, shape index: {}]
  %s2 = inlined_call_operand.hbm [shape: f32[1,512], index: 2, kind: input, shape index: {}]
  %s3 = inlined_call_operand.hbm [shape: bf16[512,256], index: 3, kind: input, shape index: {}]
  %s4 = inlined_call_operand.vmem [shape: f32[1,256], index: 4, kind: input, shape index: {}]
  %s5 = inlined_call_operand.hbm [shape: bf16[256,128], index: 5, kind: input, shape index: {}]
  %s6 = inlined_call_operand.vmem [shape: f32[1,128], index: 6, kind: input, shape index: {}]
  %s7 = inlined_call_operand.hbm [shape: bf16[8,128], index: 7, kind: output, shape index: {}]
  %s8 = sld [smem:[#allocation0]]
  $region58: #{tpu_custom_call.1} parent=0
    _
  %s10 = ssub.s32 1, %s8
  %s11 = scalar_select 0, %s10, %s8
  $region1: #{tpu_custom_call.1} parent=0
    #allocation2 [shape = 'u8[8192]{0}', space=vmem, size = 0x2000, scoped, tag = 'input window, operand 0, single buffered']
    #allocation3 [shape = 's32[1]{0}', space=sflag, size = 0x4, scoped, tag = 'scoped memory for tpu_custom_call.1']
    #allocation4 [shape = 's32[1]{0}', space=sflag, size = 0x4, scoped, tag = 'scoped memory for tpu_custom_call.1']
    #allocation5 [shape = 'u8[16384]{0}', space=vmem, size = 0x4000, scoped, tag = 'input window, operand 1, single buffered']
    #allocation6 [shape = 's32[1]{0}', space=sflag, size = 0x4, scoped, tag = 'scoped memory for tpu_custom_call.1']
    #allocation7 [shape = 'u8[2048]{0}', space=vmem, size = 0x800, scoped, tag = 'input window, operand 2, single buffered']
    #allocation8 [shape = 'u8[262144]{0}', space=vmem, size = 0x40000, scoped, tag = 'input window, operand 3, single buffered']
    #allocation9 [shape = 's32[1]{0}', space=sflag, size = 0x4, scoped, tag = 'scoped memory for tpu_custom_call.1']
    #allocation10 [shape = 'u8[65536]{0}', space=vmem, size = 0x10000, scoped, tag = 'input window, operand 5, single buffered']
    #allocation11 [shape = 'u8[4096]{0}', space=vmem, size = 0x1000, scoped, tag = 'output window, operand 0, single buffered']
    %12 = vsyncpa [#allocation3], 0
    %13 = vsyncpa [#allocation6], 0
    %14 = vsyncpa [#allocation9], 0
    %15 = vsyncpa [#allocation4], 0
    // Predicated region
    $region2: #{tpu_custom_call.1} parent=1 // pred_check
      _
    $region3: #{tpu_custom_call.1} parent=1 // pred_check_branch
      %17 = sbr.rel (0) target = $region5
    $region4: #{tpu_custom_call.1} parent=1 // pred_region
      %19 = vsyncadd [#allocation3], 128
      %s20 = sshll.u32 %s0, 4
      %s21 = int_to_ptr.hbm [resolvable:$true] %s20
      %s22 = sshll.u32 [#allocation2], 4
      %s23 = int_to_ptr.vmem [resolvable:$true] %s22
      %28 = dma.hbm_to_vmem [thread:$0]  %s21, 128, %s23, [#allocation3], 128, 128, 8
    $region5: #{tpu_custom_call.1} parent=1 // pred_fallthru
      _
    // Predicated region
    $region6: #{tpu_custom_call.1} parent=1 // pred_check
      _
    $region7: #{tpu_custom_call.1} parent=1 // pred_check_branch
      %30 = sbr.rel (0) target = $region9
    $region8: #{tpu_custom_call.1} parent=1 // pred_region
      %32 = vsyncadd [#allocation6], 0
      %s33 = sshll.u32 %s1, 4
      %s34 = int_to_ptr.hbm [resolvable:$true] %s33
      %s35 = sshll.u32 [#allocation5], 4
      %s36 = int_to_ptr.vmem [resolvable:$true] %s35
      %41 = dma.hbm_to_vmem [thread:$0]  %s34, 512, %s36, [#allocation6], 256, 256, 16
    $region9: #{tpu_custom_call.1} parent=1 // pred_fallthru
      _
    // Predicated region
    $region10: #{tpu_custom_call.1} parent=1 // pred_check
      _
    $region11: #{tpu_custom_call.1} parent=1 // pred_check_branch
      %43 = sbr.rel (0) target = $region13
    $region12: #{tpu_custom_call.1} parent=1 // pred_region
      %45 = vsyncadd [#allocation6], 0
      %s47 = sshll.u32 %s2, 4
      %s48 = int_to_ptr.hbm [resolvable:$true] %s47
      %s49 = sshll.u32 [#allocation7], 4
      %s50 = int_to_ptr.vmem [resolvable:$true] %s49
      %52 = dma.hbm_to_vmem [thread:$0]  %s48, 64, %s50, [#allocation6]
    $region13: #{tpu_custom_call.1} parent=1 // pred_fallthru
      _
    // Predicated region
    $region14: #{tpu_custom_call.1} parent=1 // pred_check
      _
    $region15: #{tpu_custom_call.1} parent=1 // pred_check_branch
      %54 = sbr.rel (0) target = $region17
    $region16: #{tpu_custom_call.1} parent=1 // pred_region
      %56 = vsyncadd [#allocation9], 0
      %s57 = sshll.u32 %s3, 4
      %s58 = int_to_ptr.hbm [resolvable:$true] %s57
      %s59 = sshll.u32 [#allocation8], 4
      %s60 = int_to_ptr.vmem [resolvable:$true] %s59
      %65 = dma.hbm_to_vmem [thread:$0]  %s58, 8192, %s60, [#allocation9], 128, 128, 8
    $region17: #{tpu_custom_call.1} parent=1 // pred_fallthru
      _
    // Predicated region
    $region18: #{tpu_custom_call.1} parent=1 // pred_check
      _
    $region19: #{tpu_custom_call.1} parent=1 // pred_check_branch
      %67 = sbr.rel (0) target = $region21
    $region20: #{tpu_custom_call.1} parent=1 // pred_region
      _
    $region21: #{tpu_custom_call.1} parent=1 // pred_fallthru
      _
    // Predicated region
    $region22: #{tpu_custom_call.1} parent=1 // pred_check
      _
    $region23: #{tpu_custom_call.1} parent=1 // pred_check_branch
      %69 = sbr.rel (0) target = $region25
    $region24: #{tpu_custom_call.1} parent=1 // pred_region
      %71 = vsyncadd [#allocation9], 0
      %s72 = sshll.u32 %s5, 4
      %s73 = int_to_ptr.hbm [resolvable:$true] %s72
      %s74 = sshll.u32 [#allocation10], 4
      %s75 = int_to_ptr.vmem [resolvable:$true] %s74
      %80 = dma.hbm_to_vmem [thread:$0]  %s73, 2048, %s75, [#allocation9], 64, 64, 4
    $region25: #{tpu_custom_call.1} parent=1 // pred_fallthru
      _
    // Predicated region
    $region26: #{tpu_custom_call.1} parent=1 // pred_check
      _
    $region27: #{tpu_custom_call.1} parent=1 // pred_check_branch
      %82 = sbr.rel (0) target = $region29
    $region28: #{tpu_custom_call.1} parent=1 // pred_region
      _
    $region29: #{tpu_custom_call.1} parent=1 // pred_fallthru
      _
    // Predicated region
    $region30: #{tpu_custom_call.1} parent=1 // pred_check
      _
    $region31: #{tpu_custom_call.1} parent=1 // pred_check_branch
      %84 = sbr.rel (0) target = $region33
    $region32: #{tpu_custom_call.1} parent=1 // pred_region
      %86 = dma.done [#allocation3], 256
    $region33: #{tpu_custom_call.1} parent=1 // pred_fallthru
      _
    // Predicated region
    $region34: #{tpu_custom_call.1} parent=1 // pred_check
      _
    $region35: #{tpu_custom_call.1} parent=1 // pred_check_branch
      %88 = sbr.rel (0) target = $region37
    $region36: #{tpu_custom_call.1} parent=1 // pred_region
      %90 = dma.done [#allocation6], 512
    $region37: #{tpu_custom_call.1} parent=1 // pred_fallthru
      _
    // Predicated region
    $region38: #{tpu_custom_call.1} parent=1 // pred_check
      _
    $region39: #{tpu_custom_call.1} parent=1 // pred_check_branch
      %92 = sbr.rel (0) target = $region41
    $region40: #{tpu_custom_call.1} parent=1 // pred_region
      %94 = dma.done [#allocation6], 64
    $region41: #{tpu_custom_call.1} parent=1 // pred_fallthru
      _
    // Predicated region
    $region42: #{tpu_custom_call.1} parent=1 // pred_check
      _
    $region43: #{tpu_custom_call.1} parent=1 // pred_check_branch
      %96 = sbr.rel (0) target = $region45
    $region44: #{tpu_custom_call.1} parent=1 // pred_region
      %98 = dma.done [#allocation9], 8192
    $region45: #{tpu_custom_call.1} parent=1 // pred_fallthru
      _
    // Predicated region
    $region46: #{tpu_custom_call.1} parent=1 // pred_check
      _
    $region47: #{tpu_custom_call.1} parent=1 // pred_check_branch
      %100 = sbr.rel (0) target = $region49
    $region48: #{tpu_custom_call.1} parent=1 // pred_region
      %102 = dma.done [#allocation9], 2048
    $region49: #{tpu_custom_call.1} parent=1 // pred_fallthru
      _
    %v104 = vld [vmem:[#allocation2] sm:$0xff]
    %v105 = vld [vmem:[#allocation2 + $0x8] sm:$0xff]
    %v106 = vpack.c.bf16 %v105, %v104
    %v107 = vld [vmem:[#allocation5] sm:$0xff]
    %v108 = vld [vmem:[#allocation5 + $0x8] sm:$0xff]
    %v109 = vld [vmem:[#allocation5 + $0x10] sm:$0xff]
    %v110 = vld [vmem:[#allocation5 + $0x18] sm:$0xff]
    %v111 = vld [vmem:[#allocation7] sm:$0xf]
    %v113 = vperm.slane %v111, 0
    %v114 = vperm.slane %v111, 1
    %v115 = vperm.slane %v111, 2
    %v116 = vperm.slane %v111, 3
    %v125 = vunpack.c.l.b16 %v107
    %v126 = vunpack.c.h.b16 %v107
    %v127 = vunpack.c.l.b16 %v108
    %v128 = vunpack.c.h.b16 %v108
    %v129 = vunpack.c.l.b16 %v109
    %v130 = vunpack.c.h.b16 %v109
    %v131 = vunpack.c.l.b16 %v110
    %v132 = vunpack.c.h.b16 %v110
    %v133 = vpack.c.b16 %v129, %v125
    %v134 = vpack.c.b16 %v130, %v126
    %v135 = vpack.c.b16 %v131, %v127
    %v136 = vpack.c.b16 %v132, %v128
    %vm141 = vcmask 130048
    %v143 = vsel %vm141, %v106, 0
    %145 = vmatpush.bf16.msra.mxu0 0
    %146 = vmatpush.bf16.msra.mxu0 0
    %147 = vmatpush.bf16.msra.mxu0 0
    %148 = vmatpush.bf16.msra.mxu0 0
    %149 = vmatpush.bf16.msra.mxu0 0
    %150 = vmatpush.bf16.msra.mxu0 0
    %151 = vmatpush.bf16.msra.mxu0 0
    %152 = vmatpush.bf16.msra.mxu0 %v133
    %153 = vmatmul.bf16.gmra.mxu0 %v143
    %v154 = vpop.f32.mrf.mxu0
    %v155 = vadd.f32 %v113, %v154
    %v156 = vpop.f32.mrf.mxu0
    %v157 = vadd.f32 %v113, %v156
    %158 = vdwg.mxu0
    %159 = vmatpush.bf16.msra.mxu0 0
    %160 = vmatpush.bf16.msra.mxu0 0
    %161 = vmatpush.bf16.msra.mxu0 0
    %162 = vmatpush.bf16.msra.mxu0 0
    %163 = vmatpush.bf16.msra.mxu0 0
    %164 = vmatpush.bf16.msra.mxu0 0
    %165 = vmatpush.bf16.msra.mxu0 0
    %166 = vmatpush.bf16.msra.mxu0 %v134
    %167 = vmatmul.bf16.gmra.mxu0 %v143
    %v168 = vpop.f32.mrf.mxu0
    %v169 = vadd.f32 %v114, %v168
    %v170 = vpop.f32.mrf.mxu0
    %v171 = vadd.f32 %v114, %v170
    %172 = vdwg.mxu0
    %173 = vmatpush.bf16.msra.mxu0 0
    %174 = vmatpush.bf16.msra.mxu0 0
    %175 = vmatpush.bf16.msra.mxu0 0
    %176 = vmatpush.bf16.msra.mxu0 0
    %177 = vmatpush.bf16.msra.mxu0 0
    %178 = vmatpush.bf16.msra.mxu0 0
    %179 = vmatpush.bf16.msra.mxu0 0
    %180 = vmatpush.bf16.msra.mxu0 %v135
    %181 = vmatmul.bf16.gmra.mxu0 %v143
    %v182 = vpop.f32.mrf.mxu0
    %v183 = vadd.f32 %v115, %v182
    %v184 = vpop.f32.mrf.mxu0
    %v185 = vadd.f32 %v115, %v184
    %186 = vdwg.mxu0
    %187 = vmatpush.bf16.msra.mxu0 0
    %188 = vmatpush.bf16.msra.mxu0 0
    %189 = vmatpush.bf16.msra.mxu0 0
    %190 = vmatpush.bf16.msra.mxu0 0
    %191 = vmatpush.bf16.msra.mxu0 0
    %192 = vmatpush.bf16.msra.mxu0 0
    %193 = vmatpush.bf16.msra.mxu0 0
    %194 = vmatpush.bf16.msra.mxu0 %v136
    %195 = vmatmul.bf16.gmra.mxu0 %v143
    %v196 = vpop.f32.mrf.mxu0
    %v197 = vadd.f32 %v116, %v196
    %v198 = vpop.f32.mrf.mxu0
    %v199 = vadd.f32 %v116, %v198
    %200 = vdwg.mxu0
    %v201 = vmax.f32 %v155, 0.0
    %v202 = vmax.f32 %v169, 0.0
    %v203 = vmax.f32 %v183, 0.0
    %v204 = vmax.f32 %v197, 0.0
    %v205 = vmax.f32 %v157, 0.0
    %v206 = vmax.f32 %v171, 0.0
    %v207 = vmax.f32 %v185, 0.0
    %v208 = vmax.f32 %v199, 0.0
    %v209 = vpack.c.bf16 %v205, %v201
    %v210 = vpack.c.bf16 %v206, %v202
    %v211 = vpack.c.bf16 %v207, %v203
    %v212 = vpack.c.bf16 %v208, %v204
    %v213 = vld [vmem:[#allocation8] sm:$0xff]
    %v214 = vld [vmem:[#allocation8 + $0x8] sm:$0xff]
    %v215 = vld [vmem:[#allocation8 + $0x10] sm:$0xff]
    %v216 = vld [vmem:[#allocation8 + $0x18] sm:$0xff]
    %v217 = vld [vmem:[#allocation8 + $0x20] sm:$0xff]
    %v218 = vld [vmem:[#allocation8 + $0x28] sm:$0xff]
    %v219 = vld [vmem:[#allocation8 + $0x30] sm:$0xff]
    %v220 = vld [vmem:[#allocation8 + $0x38] sm:$0xff]
    %v221 = vld [vmem:[#allocation8 + $0x40] sm:$0xff]
    %v222 = vld [vmem:[#allocation8 + $0x48] sm:$0xff]
    %v223 = vld [vmem:[#allocation8 + $0x50] sm:$0xff]
    %v224 = vld [vmem:[#allocation8 + $0x58] sm:$0xff]
    %v225 = vld [vmem:[#allocation8 + $0x60] sm:$0xff]
    %v226 = vld [vmem:[#allocation8 + $0x68] sm:$0xff]
    %v227 = vld [vmem:[#allocation8 + $0x70] sm:$0xff]
    %v228 = vld [vmem:[#allocation8 + $0x78] sm:$0xff]
    %v229 = vld [vmem:[#allocation8 + $0x80] sm:$0xff]
    %v230 = vld [vmem:[#allocation8 + $0x88] sm:$0xff]
    %v231 = vld [vmem:[#allocation8 + $0x90] sm:$0xff]
    %v232 = vld [vmem:[#allocation8 + $0x98] sm:$0xff]
    %v233 = vld [vmem:[#allocation8 + $0xa0] sm:$0xff]
    %v234 = vld [vmem:[#allocation8 + $0xa8] sm:$0xff]
    %v235 = vld [vmem:[#allocation8 + $0xb0] sm:$0xff]
    %v236 = vld [vmem:[#allocation8 + $0xb8] sm:$0xff]
    %v237 = vld [vmem:[#allocation8 + $0xc0] sm:$0xff]
    %v238 = vld [vmem:[#allocation8 + $0xc8] sm:$0xff]
    %v239 = vld [vmem:[#allocation8 + $0xd0] sm:$0xff]
    %v240 = vld [vmem:[#allocation8 + $0xd8] sm:$0xff]
    %v241 = vld [vmem:[#allocation8 + $0xe0] sm:$0xff]
    %v242 = vld [vmem:[#allocation8 + $0xe8] sm:$0xff]
    %v243 = vld [vmem:[#allocation8 + $0xf0] sm:$0xff]
    %v244 = vld [vmem:[#allocation8 + $0xf8] sm:$0xff]
    %v245 = vld [vmem:[#allocation8 + $0x100] sm:$0xff]
    %v246 = vld [vmem:[#allocation8 + $0x108] sm:$0xff]
    %v247 = vld [vmem:[#allocation8 + $0x110] sm:$0xff]
    %v248 = vld [vmem:[#allocation8 + $0x118] sm:$0xff]
    %v249 = vld [vmem:[#allocation8 + $0x120] sm:$0xff]
    %v250 = vld [vmem:[#allocation8 + $0x128] sm:$0xff]
    %v251 = vld [vmem:[#allocation8 + $0x130] sm:$0xff]
    %v252 = vld [vmem:[#allocation8 + $0x138] sm:$0xff]
    %v253 = vld [vmem:[#allocation8 + $0x140] sm:$0xff]
    %v254 = vld [vmem:[#allocation8 + $0x148] sm:$0xff]
    %v255 = vld [vmem:[#allocation8 + $0x150] sm:$0xff]
    %v256 = vld [vmem:[#allocation8 + $0x158] sm:$0xff]
    %v257 = vld [vmem:[#allocation8 + $0x160] sm:$0xff]
    %v258 = vld [vmem:[#allocation8 + $0x168] sm:$0xff]
    %v259 = vld [vmem:[#allocation8 + $0x170] sm:$0xff]
    %v260 = vld [vmem:[#allocation8 + $0x178] sm:$0xff]
    %v261 = vld [vmem:[#allocation8 + $0x180] sm:$0xff]
    %v262 = vld [vmem:[#allocation8 + $0x188] sm:$0xff]
    %v263 = vld [vmem:[#allocation8 + $0x190] sm:$0xff]
    %v264 = vld [vmem:[#allocation8 + $0x198] sm:$0xff]
    %v265 = vld [vmem:[#allocation8 + $0x1a0] sm:$0xff]
    %v266 = vld [vmem:[#allocation8 + $0x1a8] sm:$0xff]
    %v267 = vld [vmem:[#allocation8 + $0x1b0] sm:$0xff]
    %v268 = vld [vmem:[#allocation8 + $0x1b8] sm:$0xff]
    %v269 = vld [vmem:[#allocation8 + $0x1c0] sm:$0xff]
    %v270 = vld [vmem:[#allocation8 + $0x1c8] sm:$0xff]
    %v271 = vld [vmem:[#allocation8 + $0x1d0] sm:$0xff]
    %v272 = vld [vmem:[#allocation8 + $0x1d8] sm:$0xff]
    %v273 = vld [vmem:[#allocation8 + $0x1e0] sm:$0xff]
    %v274 = vld [vmem:[#allocation8 + $0x1e8] sm:$0xff]
    %v275 = vld [vmem:[#allocation8 + $0x1f0] sm:$0xff]
    %v276 = vld [vmem:[#allocation8 + $0x1f8] sm:$0xff]
    %v277 = vld [vmem:[%s4] sm:$0x3]
    %v279 = vperm.slane %v277, 0
    %v280 = vperm.slane %v277, 1
    %v347 = vunpack.c.l.b16 %v213
    %v348 = vunpack.c.h.b16 %v213
    %v349 = vunpack.c.l.b16 %v214
    %v350 = vunpack.c.h.b16 %v214
    %v351 = vunpack.c.l.b16 %v215
    %v352 = vunpack.c.h.b16 %v215
    %v353 = vunpack.c.l.b16 %v216
    %v354 = vunpack.c.h.b16 %v216
    %v355 = vunpack.c.l.b16 %v217
    %v356 = vunpack.c.h.b16 %v217
    %v357 = vunpack.c.l.b16 %v218
    %v358 = vunpack.c.h.b16 %v218
    %v359 = vunpack.c.l.b16 %v219
    %v360 = vunpack.c.h.b16 %v219
    %v361 = vunpack.c.l.b16 %v220
    %v362 = vunpack.c.h.b16 %v220
    %v363 = vunpack.c.l.b16 %v221
    %v364 = vunpack.c.h.b16 %v221
    %v365 = vunpack.c.l.b16 %v222
    %v366 = vunpack.c.h.b16 %v222
    %v367 = vunpack.c.l.b16 %v223
    %v368 = vunpack.c.h.b16 %v223
    %v369 = vunpack.c.l.b16 %v224
    %v370 = vunpack.c.h.b16 %v224
    %v371 = vunpack.c.l.b16 %v225
    %v372 = vunpack.c.h.b16 %v225
    %v373 = vunpack.c.l.b16 %v226
    %v374 = vunpack.c.h.b16 %v226
    %v375 = vunpack.c.l.b16 %v227
    %v376 = vunpack.c.h.b16 %v227
    %v377 = vunpack.c.l.b16 %v228
    %v378 = vunpack.c.h.b16 %v228
    %v379 = vunpack.c.l.b16 %v229
    %v380 = vunpack.c.h.b16 %v229
    %v381 = vunpack.c.l.b16 %v230
    %v382 = vunpack.c.h.b16 %v230
    %v383 = vunpack.c.l.b16 %v231
    %v384 = vunpack.c.h.b16 %v231
    %v385 = vunpack.c.l.b16 %v232
    %v386 = vunpack.c.h.b16 %v232
    %v387 = vunpack.c.l.b16 %v233
    %v388 = vunpack.c.h.b16 %v233
    %v389 = vunpack.c.l.b16 %v234
    %v390 = vunpack.c.h.b16 %v234
    %v391 = vunpack.c.l.b16 %v235
    %v392 = vunpack.c.h.b16 %v235
    %v393 = vunpack.c.l.b16 %v236
    %v394 = vunpack.c.h.b16 %v236
    %v395 = vunpack.c.l.b16 %v237
    %v396 = vunpack.c.h.b16 %v237
    %v397 = vunpack.c.l.b16 %v238
    %v398 = vunpack.c.h.b16 %v238
    %v399 = vunpack.c.l.b16 %v239
    %v400 = vunpack.c.h.b16 %v239
    %v401 = vunpack.c.l.b16 %v240
    %v402 = vunpack.c.h.b16 %v240
    %v403 = vunpack.c.l.b16 %v241
    %v404 = vunpack.c.h.b16 %v241
    %v405 = vunpack.c.l.b16 %v242
    %v406 = vunpack.c.h.b16 %v242
    %v407 = vunpack.c.l.b16 %v243
    %v408 = vunpack.c.h.b16 %v243
    %v409 = vunpack.c.l.b16 %v244
    %v410 = vunpack.c.h.b16 %v244
    %v411 = vunpack.c.l.b16 %v245
    %v412 = vunpack.c.h.b16 %v245
    %v413 = vunpack.c.l.b16 %v246
    %v414 = vunpack.c.h.b16 %v246
    %v415 = vunpack.c.l.b16 %v247
    %v416 = vunpack.c.h.b16 %v247
    %v417 = vunpack.c.l.b16 %v248
    %v418 = vunpack.c.h.b16 %v248
    %v419 = vunpack.c.l.b16 %v249
    %v420 = vunpack.c.h.b16 %v249
    %v421 = vunpack.c.l.b16 %v250
    %v422 = vunpack.c.h.b16 %v250
    %v423 = vunpack.c.l.b16 %v251
    %v424 = vunpack.c.h.b16 %v251
    %v425 = vunpack.c.l.b16 %v252
    %v426 = vunpack.c.h.b16 %v252
    %v427 = vunpack.c.l.b16 %v253
    %v428 = vunpack.c.h.b16 %v253
    %v429 = vunpack.c.l.b16 %v254
    %v430 = vunpack.c.h.b16 %v254
    %v431 = vunpack.c.l.b16 %v255
    %v432 = vunpack.c.h.b16 %v255
    %v433 = vunpack.c.l.b16 %v256
    %v434 = vunpack.c.h.b16 %v256
    %v435 = vunpack.c.l.b16 %v257
    %v436 = vunpack.c.h.b16 %v257
    %v437 = vunpack.c.l.b16 %v258
    %v438 = vunpack.c.h.b16 %v258
    %v439 = vunpack.c.l.b16 %v259
    %v440 = vunpack.c.h.b16 %v259
    %v441 = vunpack.c.l.b16 %v260
    %v442 = vunpack.c.h.b16 %v260
    %v443 = vunpack.c.l.b16 %v261
    %v444 = vunpack.c.h.b16 %v261
    %v445 = vunpack.c.l.b16 %v262
    %v446 = vunpack.c.h.b16 %v262
    %v447 = vunpack.c.l.b16 %v263
    %v448 = vunpack.c.h.b16 %v263
    %v449 = vunpack.c.l.b16 %v264
    %v450 = vunpack.c.h.b16 %v264
    %v451 = vunpack.c.l.b16 %v265
    %v452 = vunpack.c.h.b16 %v265
    %v453 = vunpack.c.l.b16 %v266
    %v454 = vunpack.c.h.b16 %v266
    %v455 = vunpack.c.l.b16 %v267
    %v456 = vunpack.c.h.b16 %v267
    %v457 = vunpack.c.l.b16 %v268
    %v458 = vunpack.c.h.b16 %v268
    %v459 = vunpack.c.l.b16 %v269
    %v460 = vunpack.c.h.b16 %v269
    %v461 = vunpack.c.l.b16 %v270
    %v462 = vunpack.c.h.b16 %v270
    %v463 = vunpack.c.l.b16 %v271
    %v464 = vunpack.c.h.b16 %v271
    %v465 = vunpack.c.l.b16 %v272
    %v466 = vunpack.c.h.b16 %v272
    %v467 = vunpack.c.l.b16 %v273
    %v468 = vunpack.c.h.b16 %v273
    %v469 = vunpack.c.l.b16 %v274
    %v470 = vunpack.c.h.b16 %v274
    %v471 = vunpack.c.l.b16 %v275
    %v472 = vunpack.c.h.b16 %v275
    %v473 = vunpack.c.l.b16 %v276
    %v474 = vunpack.c.h.b16 %v276
    %v475 = vpack.c.b16 %v349, %v347
    %v476 = vpack.c.b16 %v350, %v348
    %v477 = vpack.c.b16 %v353, %v351
    %v478 = vpack.c.b16 %v354, %v352
    %v479 = vpack.c.b16 %v357, %v355
    %v480 = vpack.c.b16 %v358, %v356
    %v481 = vpack.c.b16 %v361, %v359
    %v482 = vpack.c.b16 %v362, %v360
    %v483 = vpack.c.b16 %v365, %v363
    %v484 = vpack.c.b16 %v366, %v364
    %v485 = vpack.c.b16 %v369, %v367
    %v486 = vpack.c.b16 %v370, %v368
    %v487 = vpack.c.b16 %v373, %v371
    %v488 = vpack.c.b16 %v374, %v372
    %v489 = vpack.c.b16 %v377, %v375
    %v490 = vpack.c.b16 %v378, %v376
    %v491 = vpack.c.b16 %v381, %v379
    %v492 = vpack.c.b16 %v382, %v380
    %v493 = vpack.c.b16 %v385, %v383
    %v494 = vpack.c.b16 %v386, %v384
    %v495 = vpack.c.b16 %v389, %v387
    %v496 = vpack.c.b16 %v390, %v388
    %v497 = vpack.c.b16 %v393, %v391
    %v498 = vpack.c.b16 %v394, %v392
    %v499 = vpack.c.b16 %v397, %v395
    %v500 = vpack.c.b16 %v398, %v396
    %v501 = vpack.c.b16 %v401, %v399
    %v502 = vpack.c.b16 %v402, %v400
    %v503 = vpack.c.b16 %v405, %v403
    %v504 = vpack.c.b16 %v406, %v404
    %v505 = vpack.c.b16 %v409, %v407
    %v506 = vpack.c.b16 %v410, %v408
    %v507 = vpack.c.b16 %v413, %v411
    %v508 = vpack.c.b16 %v414, %v412
    %v509 = vpack.c.b16 %v417, %v415
    %v510 = vpack.c.b16 %v418, %v416
    %v511 = vpack.c.b16 %v421, %v419
    %v512 = vpack.c.b16 %v422, %v420
    %v513 = vpack.c.b16 %v425, %v423
    %v514 = vpack.c.b16 %v426, %v424
    %v515 = vpack.c.b16 %v429, %v427
    %v516 = vpack.c.b16 %v430, %v428
    %v517 = vpack.c.b16 %v433, %v431
    %v518 = vpack.c.b16 %v434, %v432
    %v519 = vpack.c.b16 %v437, %v435
    %v520 = vpack.c.b16 %v438, %v436
    %v521 = vpack.c.b16 %v441, %v439
    %v522 = vpack.c.b16 %v442, %v440
    %v523 = vpack.c.b16 %v445, %v443
    %v524 = vpack.c.b16 %v446, %v444
    %v525 = vpack.c.b16 %v449, %v447
    %v526 = vpack.c.b16 %v450, %v448
    %v527 = vpack.c.b16 %v453, %v451
    %v528 = vpack.c.b16 %v454, %v452
    %v529 = vpack.c.b16 %v457, %v455
    %v530 = vpack.c.b16 %v458, %v456
    %v531 = vpack.c.b16 %v461, %v459
    %v532 = vpack.c.b16 %v462, %v460
    %v533 = vpack.c.b16 %v465, %v463
    %v534 = vpack.c.b16 %v466, %v464
    %v535 = vpack.c.b16 %v469, %v467
    %v536 = vpack.c.b16 %v470, %v468
    %v537 = vpack.c.b16 %v473, %v471
    %v538 = vpack.c.b16 %v474, %v472
    %603 = vmatpush.bf16.msra.mxu0 %v489
    %604 = vmatpush.bf16.msra.mxu0 %v487
    %605 = vmatpush.bf16.msra.mxu0 %v485
    %606 = vmatpush.bf16.msra.mxu0 %v483
    %607 = vmatpush.bf16.msra.mxu0 %v481
    %608 = vmatpush.bf16.msra.mxu0 %v479
    %609 = vmatpush.bf16.msra.mxu0 %v477
    %610 = vmatpush.bf16.msra.mxu0 %v475
    %611 = vmatmul.bf16.gmra.mxu0 %v209
    %v612 = vpop.f32.mrf.mxu0
    %v613 = vadd.f32 %v279, %v612
    %v614 = vpop.f32.mrf.mxu0
    %v615 = vadd.f32 %v279, %v614
    %616 = vdwg.mxu0
    %617 = vmatpush.bf16.msra.mxu0 %v505
    %618 = vmatpush.bf16.msra.mxu0 %v503
    %619 = vmatpush.bf16.msra.mxu0 %v501
    %620 = vmatpush.bf16.msra.mxu0 %v499
    %621 = vmatpush.bf16.msra.mxu0 %v497
    %622 = vmatpush.bf16.msra.mxu0 %v495
    %623 = vmatpush.bf16.msra.mxu0 %v493
    %624 = vmatpush.bf16.msra.mxu0 %v491
    %625 = vmatmul.bf16.gmra.mxu0 %v210
    %v626 = vpop.f32.mrf.mxu0
    %v627 = vadd.f32 %v613, %v626
    %v628 = vpop.f32.mrf.mxu0
    %v629 = vadd.f32 %v615, %v628
    %630 = vdwg.mxu0
    %631 = vmatpush.bf16.msra.mxu0 %v521
    %632 = vmatpush.bf16.msra.mxu0 %v519
    %633 = vmatpush.bf16.msra.mxu0 %v517
    %634 = vmatpush.bf16.msra.mxu0 %v515
    %635 = vmatpush.bf16.msra.mxu0 %v513
    %636 = vmatpush.bf16.msra.mxu0 %v511
    %637 = vmatpush.bf16.msra.mxu0 %v509
    %638 = vmatpush.bf16.msra.mxu0 %v507
    %639 = vmatmul.bf16.gmra.mxu0 %v211
    %v640 = vpop.f32.mrf.mxu0
    %v641 = vadd.f32 %v627, %v640
    %v642 = vpop.f32.mrf.mxu0
    %v643 = vadd.f32 %v629, %v642
    %644 = vdwg.mxu0
    %645 = vmatpush.bf16.msra.mxu0 %v537
    %646 = vmatpush.bf16.msra.mxu0 %v535
    %647 = vmatpush.bf16.msra.mxu0 %v533
    %648 = vmatpush.bf16.msra.mxu0 %v531
    %649 = vmatpush.bf16.msra.mxu0 %v529
    %650 = vmatpush.bf16.msra.mxu0 %v527
    %651 = vmatpush.bf16.msra.mxu0 %v525
    %652 = vmatpush.bf16.msra.mxu0 %v523
    %653 = vmatmul.bf16.gmra.mxu0 %v212
    %v654 = vpop.f32.mrf.mxu0
    %v655 = vadd.f32 %v641, %v654
    %v656 = vpop.f32.mrf.mxu0
    %v657 = vadd.f32 %v643, %v656
    %658 = vdwg.mxu0
    %659 = vmatpush.bf16.msra.mxu0 %v490
    %660 = vmatpush.bf16.msra.mxu0 %v488
    %661 = vmatpush.bf16.msra.mxu0 %v486
    %662 = vmatpush.bf16.msra.mxu0 %v484
    %663 = vmatpush.bf16.msra.mxu0 %v482
    %664 = vmatpush.bf16.msra.mxu0 %v480
    %665 = vmatpush.bf16.msra.mxu0 %v478
    %666 = vmatpush.bf16.msra.mxu0 %v476
    %667 = vmatmul.bf16.gmra.mxu0 %v209
    %v668 = vpop.f32.mrf.mxu0
    %v669 = vadd.f32 %v280, %v668
    %v670 = vpop.f32.mrf.mxu0
    %v671 = vadd.f32 %v280, %v670
    %672 = vdwg.mxu0
    %673 = vmatpush.bf16.msra.mxu0 %v506
    %674 = vmatpush.bf16.msra.mxu0 %v504
    %675 = vmatpush.bf16.msra.mxu0 %v502
    %676 = vmatpush.bf16.msra.mxu0 %v500
    %677 = vmatpush.bf16.msra.mxu0 %v498
    %678 = vmatpush.bf16.msra.mxu0 %v496
    %679 = vmatpush.bf16.msra.mxu0 %v494
    %680 = vmatpush.bf16.msra.mxu0 %v492
    %681 = vmatmul.bf16.gmra.mxu0 %v210
    %v682 = vpop.f32.mrf.mxu0
    %v683 = vadd.f32 %v669, %v682
    %v684 = vpop.f32.mrf.mxu0
    %v685 = vadd.f32 %v671, %v684
    %686 = vdwg.mxu0
    %687 = vmatpush.bf16.msra.mxu0 %v522
    %688 = vmatpush.bf16.msra.mxu0 %v520
    %689 = vmatpush.bf16.msra.mxu0 %v518
    %690 = vmatpush.bf16.msra.mxu0 %v516
    %691 = vmatpush.bf16.msra.mxu0 %v514
    %692 = vmatpush.bf16.msra.mxu0 %v512
    %693 = vmatpush.bf16.msra.mxu0 %v510
    %694 = vmatpush.bf16.msra.mxu0 %v508
    %695 = vmatmul.bf16.gmra.mxu0 %v211
    %v696 = vpop.f32.mrf.mxu0
    %v697 = vadd.f32 %v683, %v696
    %v698 = vpop.f32.mrf.mxu0
    %v699 = vadd.f32 %v685, %v698
    %700 = vdwg.mxu0
    %701 = vmatpush.bf16.msra.mxu0 %v538
    %702 = vmatpush.bf16.msra.mxu0 %v536
    %703 = vmatpush.bf16.msra.mxu0 %v534
    %704 = vmatpush.bf16.msra.mxu0 %v532
    %705 = vmatpush.bf16.msra.mxu0 %v530
    %706 = vmatpush.bf16.msra.mxu0 %v528
    %707 = vmatpush.bf16.msra.mxu0 %v526
    %708 = vmatpush.bf16.msra.mxu0 %v524
    %709 = vmatmul.bf16.gmra.mxu0 %v212
    %v710 = vpop.f32.mrf.mxu0
    %v711 = vadd.f32 %v697, %v710
    %v712 = vpop.f32.mrf.mxu0
    %v713 = vadd.f32 %v699, %v712
    %714 = vdwg.mxu0
    %v715 = vmax.f32 %v655, 0.0
    %v716 = vmax.f32 %v711, 0.0
    %v717 = vmax.f32 %v657, 0.0
    %v718 = vmax.f32 %v713, 0.0
    %v719 = vpack.c.bf16 %v717, %v715
    %v720 = vpack.c.bf16 %v718, %v716
    %v721 = vld [vmem:[#allocation10] sm:$0xf]
    %v722 = vld [vmem:[#allocation10 + $0x4] sm:$0xf]
    %v723 = vld [vmem:[#allocation10 + $0x8] sm:$0xf]
    %v724 = vld [vmem:[#allocation10 + $0xc] sm:$0xf]
    %v725 = vld [vmem:[#allocation10 + $0x10] sm:$0xf]
    %v726 = vld [vmem:[#allocation10 + $0x14] sm:$0xf]
    %v727 = vld [vmem:[#allocation10 + $0x18] sm:$0xf]
    %v728 = vld [vmem:[#allocation10 + $0x1c] sm:$0xf]
    %v729 = vld [vmem:[#allocation10 + $0x20] sm:$0xf]
    %v730 = vld [vmem:[#allocation10 + $0x24] sm:$0xf]
    %v731 = vld [vmem:[#allocation10 + $0x28] sm:$0xf]
    %v732 = vld [vmem:[#allocation10 + $0x2c] sm:$0xf]
    %v733 = vld [vmem:[#allocation10 + $0x30] sm:$0xf]
    %v734 = vld [vmem:[#allocation10 + $0x34] sm:$0xf]
    %v735 = vld [vmem:[#allocation10 + $0x38] sm:$0xf]
    %v736 = vld [vmem:[#allocation10 + $0x3c] sm:$0xf]
    %v737 = vld [vmem:[#allocation10 + $0x40] sm:$0xf]
    %v738 = vld [vmem:[#allocation10 + $0x44] sm:$0xf]
    %v739 = vld [vmem:[#allocation10 + $0x48] sm:$0xf]
    %v740 = vld [vmem:[#allocation10 + $0x4c] sm:$0xf]
    %v741 = vld [vmem:[#allocation10 + $0x50] sm:$0xf]
    %v742 = vld [vmem:[#allocation10 + $0x54] sm:$0xf]
    %v743 = vld [vmem:[#allocation10 + $0x58] sm:$0xf]
    %v744 = vld [vmem:[#allocation10 + $0x5c] sm:$0xf]
    %v745 = vld [vmem:[#allocation10 + $0x60] sm:$0xf]
    %v746 = vld [vmem:[#allocation10 + $0x64] sm:$0xf]
    %v747 = vld [vmem:[#allocation10 + $0x68] sm:$0xf]
    %v748 = vld [vmem:[#allocation10 + $0x6c] sm:$0xf]
    %v749 = vld [vmem:[#allocation10 + $0x70] sm:$0xf]
    %v750 = vld [vmem:[#allocation10 + $0x74] sm:$0xf]
    %v751 = vld [vmem:[#allocation10 + $0x78] sm:$0xf]
    %v752 = vld [vmem:[#allocation10 + $0x7c] sm:$0xf]
    %v753 = vld [vmem:[%s6] sm:$0x1]
    %v755 = vperm.slane %v753, 0
    %v789 = vunpack.c.l.b16 %v721
    %v790 = vunpack.c.l.b16 %v722
    %v791 = vunpack.c.l.b16 %v723
    %v792 = vunpack.c.l.b16 %v724
    %v793 = vunpack.c.l.b16 %v725
    %v794 = vunpack.c.l.b16 %v726
    %v795 = vunpack.c.l.b16 %v727
    %v796 = vunpack.c.l.b16 %v728
    %v797 = vunpack.c.l.b16 %v729
    %v798 = vunpack.c.l.b16 %v730
    %v799 = vunpack.c.l.b16 %v731
    %v800 = vunpack.c.l.b16 %v732
    %v801 = vunpack.c.l.b16 %v733
    %v802 = vunpack.c.l.b16 %v734
    %v803 = vunpack.c.l.b16 %v735
    %v804 = vunpack.c.l.b16 %v736
    %v805 = vunpack.c.l.b16 %v737
    %v806 = vunpack.c.l.b16 %v738
    %v807 = vunpack.c.l.b16 %v739
    %v808 = vunpack.c.l.b16 %v740
    %v809 = vunpack.c.l.b16 %v741
    %v810 = vunpack.c.l.b16 %v742
    %v811 = vunpack.c.l.b16 %v743
    %v812 = vunpack.c.l.b16 %v744
    %v813 = vunpack.c.l.b16 %v745
    %v814 = vunpack.c.l.b16 %v746
    %v815 = vunpack.c.l.b16 %v747
    %v816 = vunpack.c.l.b16 %v748
    %v817 = vunpack.c.l.b16 %v749
    %v818 = vunpack.c.l.b16 %v750
    %v819 = vunpack.c.l.b16 %v751
    %v820 = vunpack.c.l.b16 %v752
    %v821 = vpack.c.b16 %v790, %v789
    %v822 = vpack.c.b16 %v792, %v791
    %v823 = vpack.c.b16 %v794, %v793
    %v824 = vpack.c.b16 %v796, %v795
    %v825 = vpack.c.b16 %v798, %v797
    %v826 = vpack.c.b16 %v800, %v799
    %v827 = vpack.c.b16 %v802, %v801
    %v828 = vpack.c.b16 %v804, %v803
    %v829 = vpack.c.b16 %v806, %v805
    %v830 = vpack.c.b16 %v808, %v807
    %v831 = vpack.c.b16 %v810, %v809
    %v832 = vpack.c.b16 %v812, %v811
    %v833 = vpack.c.b16 %v814, %v813
    %v834 = vpack.c.b16 %v816, %v815
    %v835 = vpack.c.b16 %v818, %v817
    %v836 = vpack.c.b16 %v820, %v819
    %853 = vmatpush.bf16.msra.mxu0 %v828
    %854 = vmatpush.bf16.msra.mxu0 %v827
    %855 = vmatpush.bf16.msra.mxu0 %v826
    %856 = vmatpush.bf16.msra.mxu0 %v825
    %857 = vmatpush.bf16.msra.mxu0 %v824
    %858 = vmatpush.bf16.msra.mxu0 %v823
    %859 = vmatpush.bf16.msra.mxu0 %v822
    %860 = vmatpush.bf16.msra.mxu0 %v821
    %861 = vmatmul.bf16.gmra.mxu0 %v719
    %v862 = vpop.f32.mrf.mxu0
    %v863 = vadd.f32 %v755, %v862
    %v864 = vpop.f32.mrf.mxu0
    %v865 = vadd.f32 %v755, %v864
    %866 = vdwg.mxu0
    %867 = vmatpush.bf16.msra.mxu0 %v836
    %868 = vmatpush.bf16.msra.mxu0 %v835
    %869 = vmatpush.bf16.msra.mxu0 %v834
    %870 = vmatpush.bf16.msra.mxu0 %v833
    %871 = vmatpush.bf16.msra.mxu0 %v832
    %872 = vmatpush.bf16.msra.mxu0 %v831
    %873 = vmatpush.bf16.msra.mxu0 %v830
    %874 = vmatpush.bf16.msra.mxu0 %v829
    %875 = vmatmul.bf16.gmra.mxu0 %v720
    %v876 = vpop.f32.mrf.mxu0
    %v877 = vadd.f32 %v863, %v876
    %v878 = vpop.f32.mrf.mxu0
    %v879 = vadd.f32 %v865, %v878
    %880 = vdwg.mxu0
    %v881 = vtanh.pop %v877
    %v882 = vtanh.pop %v879
    %v883 = vpack.c.bf16 %v881, %v881
    %v884 = vpack.c.bf16 %v882, %v882
    %885 = vst [vmem:[#allocation11] sm:$0xf] %v883
    %886 = vst [vmem:[#allocation11 + $0x4] sm:$0xf] %v884
    // Predicated region
    $region50: #{tpu_custom_call.1} parent=1 // pred_check
      _
    $region51: #{tpu_custom_call.1} parent=1 // pred_check_branch
      %888 = sbr.rel (0) target = $region53
    $region52: #{tpu_custom_call.1} parent=1 // pred_region
      %890 = vsyncadd [#allocation4], 64
      %s891 = sshll.u32 [#allocation11], 4
      %s892 = int_to_ptr.vmem [resolvable:$true] %s891
      %s893 = sshll.u32 %s7, 4
      %s894 = int_to_ptr.hbm [resolvable:$true] %s893
      %899 = dma.vmem_to_hbm [thread:$0]  %s892, 64, %s894, [#allocation4], 64, 64, 4
    $region53: #{tpu_custom_call.1} parent=1 // pred_fallthru
      _
    // Predicated region
    $region54: #{tpu_custom_call.1} parent=1 // pred_check
      _
    $region55: #{tpu_custom_call.1} parent=1 // pred_check_branch
      %901 = sbr.rel (0) target = $region57
    $region56: #{tpu_custom_call.1} parent=1 // pred_region
      %903 = dma.done [#allocation4], 128
    $region57: #{tpu_custom_call.1} parent=1 // pred_fallthru
      _
    %904 = vsyncpa [#allocation3], 1
    %905 = vsyncpa [#allocation6], 1
    %906 = vsyncpa [#allocation9], 1
    %907 = vsyncpa [#allocation4], 1

</llo_original>
